<compile_context>
chip_gen: v5e
topology: v5e:2x2
jax: 0.10.0
libtpu: 0.0.40
codegen_flags: <defaults>
</compile_context>

<pallas_src>
import jax
import jax.numpy as jnp
import numpy as np
from jax.experimental import pallas as pl
from jax.experimental.pallas import tpu as pltpu

NUM_CLASSES = 4
MARGIN = 0.2
INIT_BOUNDARY = 1.2
REG_WEIGHT = 0.02
NORMALIZE_EMBEDS = True


def _round_up(v, m):
    return (v + m - 1) // m * m


def _margin_loss_tile_kernel(xr_ref, xct_ref, rpack_ref, cpack_ref, out_ref):
    """One (T, T) tile of the anchor/other pair grid.

    Accumulates [sum_pos, cnt_pos, sum_neg, cnt_neg] into lanes 0..3 of
    sublane 0 of the (8, 128) output block owned by the current row tile.
    Row-tile axis (program_id 0) is "parallel", col-tile axis is the
    "arbitrary" reduction axis.
    """
    j = pl.program_id(1)

    @pl.when(j == 0)
    def _init():
        out_ref[...] = jnp.zeros_like(out_ref)

    # Packed per-anchor (row) side data: (T, 8) -> seven (T, 1) lanes.
    rpack = rpack_ref[...]
    lab_r = rpack[:, 0:1]            # class label (f32, exact for small ints)
    bmm = rpack[:, 1:2]              # beta - margin
    bpm = rpack[:, 2:3]              # beta + margin
    nneg = rpack[:, 3:4]             # valid negatives per anchor (0 for pad)
    npos = rpack[:, 4:5]             # valid positives per anchor (0 for pad)
    sq_r = rpack[:, 5:6]             # |x_row|^2 (1.0 on the normalised path)
    id_r = rpack[:, 6:7]             # global sample id (diagonal exclusion)

    # Packed per-column side data: (8, T) -> four (1, T) sublanes.
    cpack = cpack_ref[...]
    lab_c = cpack[0:1, :]
    sq_c = cpack[1:2, :]
    valid_c = cpack[2:3, :] > 0.5    # real (non-padded) column?
    id_c = cpack[3:4, :]

    # Gram matrix on the MXU.  Column operand arrives pre-transposed
    # (d_pad, T) so the contraction is the standard (1),(0) — no in-kernel
    # transpose.  Operands may be bf16; accumulation is f32.
    gram = jax.lax.dot_general(
        xr_ref[...], xct_ref[...],
        (((1,), (0,)), ((), ())),
        preferred_element_type=jnp.float32)            # (T, T)

    d2 = (sq_r + sq_c) - 2.0 * gram
    dist = jnp.sqrt(jnp.maximum(d2, 0.0))              # (T, T)

    same = lab_r == lab_c                              # (T, T) bool
    pos_ok = same & (id_r != id_c)                     # same class, not self
    neg_ok = jnp.logical_not(same) & valid_c           # other class, real col

    zero = jnp.float32(0.0)
    pos_hinge = jnp.where(pos_ok, jnp.maximum(dist - bmm, 0.0), zero)
    neg_hinge = jnp.where(neg_ok, jnp.maximum(bpm - dist, 0.0), zero)

    # Lane-axis (XLU) reductions first, then weight by the per-anchor triplet
    # multiplicities: each (a, p) pair appears once per valid negative of a,
    # each (a, n) pair once per valid positive of a.
    pos_sum_r = jnp.sum(pos_hinge, axis=1, keepdims=True)                 # (T,1)
    pos_cnt_r = jnp.sum((pos_hinge > 0.0).astype(jnp.float32),
                        axis=1, keepdims=True)
    neg_sum_r = jnp.sum(neg_hinge, axis=1, keepdims=True)
    neg_cnt_r = jnp.sum((neg_hinge > 0.0).astype(jnp.float32),
                        axis=1, keepdims=True)

    sum_pos = jnp.sum(nneg * pos_sum_r)
    cnt_pos = jnp.sum(nneg * pos_cnt_r)
    sum_neg = jnp.sum(npos * neg_sum_r)
    cnt_neg = jnp.sum(npos * neg_cnt_r)

    # Single lane-dense accumulate into the resident (8, 128) output block.
    lane = jax.lax.broadcasted_iota(jnp.int32, (8, 128), 1)
    sub = jax.lax.broadcasted_iota(jnp.int32, (8, 128), 0)
    r0 = sub == 0
    partial = (jnp.where(r0 & (lane == 0), sum_pos, 0.0)
               + jnp.where(r0 & (lane == 1), cnt_pos, 0.0)
               + jnp.where(r0 & (lane == 2), sum_neg, 0.0)
               + jnp.where(r0 & (lane == 3), cnt_neg, 0.0))
    out_ref[...] += partial


def margin_loss(embeds, labels, boundaries, *, margin=MARGIN,
                regularization_weight=REG_WEIGHT,
                normalize_embeds=NORMALIZE_EMBEDS,
                mxu_dtype=jnp.float32, tile=512):
    """JAX/Pallas equivalent of MarginLoss.forward(embeds, labels).

    mxu_dtype=jnp.bfloat16 is the recommended setting on v5e (slow f32 MXU,
    ~820 GB/s HBM); f32 is the default for tight numerics.
    """
    n, d = embeds.shape
    labels = labels.astype(jnp.int32)
    boundaries = boundaries.astype(jnp.float32)
    num_classes = boundaries.shape[0]

    # Hoisted normalisation / squared norms: one O(N*D) pass in the wrapper
    # instead of per-tile work inside the kernel.
    x = embeds.astype(jnp.float32)
    if normalize_embeds:
        inv = jax.lax.rsqrt(
            jnp.maximum(jnp.sum(x * x, axis=1, keepdims=True), 1e-24))
        x = x * inv
        sq = jnp.ones((n,), jnp.float32)        # unit rows
    else:
        sq = jnp.sum(x * x, axis=1)

    # O(N) per-anchor statistics from class counts (AllTripletsMiner weights).
    counts = jnp.zeros((num_classes,), jnp.float32).at[labels].add(1.0)
    per_cnt = counts[labels]                    # samples sharing my class
    npos = per_cnt - 1.0                        # valid positives per anchor
    nneg = jnp.float32(n) - per_cnt             # valid negatives per anchor
    beta = boundaries[labels]                   # per-anchor boundary
    n_trip = jnp.sum(npos * nneg)               # total number of triplets
    beta_sum = jnp.sum(beta * npos * nneg)      # sum of beta over triplets

    # ----- Tile selection -------------------------------------------------
    n8 = _round_up(max(n, 1), 8)
    if n8 <= 128:
        t = n8                                  # single tile per pair axis
    else:
        t_req = max(128, (int(tile) // 128) * 128)
        # Cap so the "parallel" row-tile axis spans >= 2 tiles (keeps both
        # v7x TensorCores busy; free on single-TC v5e/v6e).
        half = max(128, (_round_up(n, 128) // 2) // 128 * 128)
        t = min(t_req, half)
    n_pad = _round_up(n, t)
    d_pad = _round_up(d, 128)
    gi = n_pad // t
    gj = n_pad // t

    # ----- Layout plumbing (all one-time XLA work) -------------------------
    x_pad = jnp.pad(x, ((0, n_pad - n), (0, d_pad - d)))
    x_mxu = x_pad.astype(mxu_dtype) if mxu_dtype != jnp.float32 else x_pad
    xt_mxu = x_mxu.T                            # (d_pad, n_pad) column operand

    labf = labels.astype(jnp.float32)
    idx = jnp.arange(n_pad, dtype=jnp.float32)

    # Packed row-side data: lanes [label, beta-m, beta+m, nneg, npos, |x|^2, id, 0].
    rpack = jnp.zeros((n_pad, 8), jnp.float32)
    rpack = rpack.at[:n, 0].set(labf)
    rpack = rpack.at[n:, 0].set(-1.0)           # padded rows: impossible label
    rpack = rpack.at[:n, 1].set(beta - margin)
    rpack = rpack.at[:n, 2].set(beta + margin)
    rpack = rpack.at[:n, 3].set(nneg)           # padded rows keep weight 0
    rpack = rpack.at[:n, 4].set(npos)
    rpack = rpack.at[:n, 5].set(sq)
    rpack = rpack.at[:, 6].set(idx)

    # Packed column-side data: sublanes [label, |x|^2, valid, id].
    cpack = jnp.zeros((8, n_pad), jnp.float32)
    cpack = cpack.at[0, :n].set(labf)
    cpack = cpack.at[0, n:].set(-1.0)
    cpack = cpack.at[1, :n].set(sq)
    cpack = cpack.at[2, :n].set(1.0)            # column-validity mask
    cpack = cpack.at[3, :].set(idx)

    itemsize_x = jnp.dtype(x_mxu.dtype).itemsize
    cost = pl.CostEstimate(
        flops=int(2 * n_pad * n_pad * d_pad + 24 * n_pad * n_pad),
        transcendentals=int(n_pad * n_pad),
        bytes_accessed=int(itemsize_x * (gi * t * d_pad + gi * gj * t * d_pad)
                           + 4 * (n_pad * 8 + 8 * n_pad) + gi * 8 * 128 * 4))

    # VMEM requirement: input double-buffers + side packs + (T,T) temporaries
    # / spill headroom.  Clamp to 32..56 MiB so it stays inside v7x's 64 MiB
    # physical VMEM while leaving compiler headroom (v5e/v6e have 128 MiB).
    vmem_est = (4 * t * d_pad * itemsize_x      # xr + xct, double-buffered
                + 4 * (t * 8 + 8 * t) * 4       # side packs, double-buffered
                + 2 * 8 * 128 * 4               # stats accumulator
                + 16 * t * t * 4)               # (T,T) temporaries / spills
    vmem_limit = int(min(max(32 * 1024 * 1024, vmem_est * 5 // 4),
                         56 * 1024 * 1024))

    stats = pl.pallas_call(
        _margin_loss_tile_kernel,
        out_shape=jax.ShapeDtypeStruct((gi * 8, 128), jnp.float32),
        grid=(gi, gj),
        in_specs=[
            pl.BlockSpec((t, d_pad), lambda i, j: (i, 0)),   # anchor rows
            pl.BlockSpec((d_pad, t), lambda i, j: (0, j)),   # cols, pre-transposed
            pl.BlockSpec((t, 8), lambda i, j: (i, 0)),       # packed row side data
            pl.BlockSpec((8, t), lambda i, j: (0, j)),       # packed col side data
        ],
        out_specs=pl.BlockSpec((8, 128), lambda i, j: (i, 0)),
        compiler_params=pltpu.CompilerParams(
            dimension_semantics=("parallel", "arbitrary"),
            vmem_limit_bytes=vmem_limit),
        cost_estimate=cost,
    )(x_mxu, xt_mxu, rpack, cpack)

    totals = jnp.sum(stats, axis=0)             # sum per-row-tile partials
    sum_pos, cnt_pos = totals[0], totals[1]
    sum_neg, cnt_neg = totals[2], totals[3]

    # loss = mean of strictly-positive entries of cat([pos_loss, neg_loss]).
    # (count == 0 with triplets present -> NaN, matching torch's empty .mean())
    loss = (sum_pos + sum_neg) / (cnt_pos + cnt_neg)
    if regularization_weight > 0:
        loss = loss + (beta_sum / jnp.maximum(n_trip, 1.0)) * regularization_weight
    # "if len(anchor_inds) == 0: return 0" branch.
    return jnp.where(n_trip > 0, loss, jnp.float32(0.0))


def _reference_loss(embeds, labels, boundaries, margin, reg, normalize):
    """Vectorised float64 numpy re-implementation of the PyTorch forward
    (explicit AllTripletsMiner triplet enumeration, for correctness checks)."""
    e = np.asarray(embeds, dtype=np.float64)
    labels = np.asarray(labels)
    b = np.asarray(boundaries, dtype=np.float64)
    if normalize:
        e = e / np.maximum(np.linalg.norm(e, axis=1, keepdims=True), 1e-12)
    n = e.shape[0]
    same = labels[:, None] == labels[None, :]
    pos_pair = same & ~np.eye(n, dtype=bool)              # (a, p)
    neg_pair = ~same                                       # (a, m)
    trip_mask = pos_pair[:, :, None] & neg_pair[:, None, :]
    a_idx, p_idx, m_idx = np.nonzero(trip_mask)
    if a_idx.size == 0:
        return 0.0
    dmat = np.sqrt(((e[:, None, :] - e[None, :, :]) ** 2).sum(-1))
    ap = dmat[a_idx, p_idx]
    an = dmat[a_idx, m_idx]
    beta = b[labels[a_idx]]
    pos = np.maximum(ap - beta + margin, 0.0)
    neg = np.maximum(beta - an + margin, 0.0)
    allv = np.concatenate([pos, neg])
    sel = allv[allv > 0]
    loss = sel.mean() if sel.size else float("nan")
    if reg > 0:
        loss = loss + beta.mean() * reg
    return float(loss)


if __name__ == "__main__":
    root = jax.random.PRNGKey(0)
    k1, k2, k3, k4, k5, k6, k7 = jax.random.split(root, 7)

    # Deterministic parameter init: boundaries = ones(num_classes) * 1.2
    boundaries = jnp.ones((NUM_CLASSES,), dtype=jnp.float32) * INIT_BOUNDARY

    # 1) Module-scale tiny batch, single tile, f32 MXU path — tight tolerance.
    N, D = 8, 32
    embeds = jax.random.normal(k1, (N, D), dtype=jnp.float32)
    labels = jnp.array([0, 0, 1, 1, 2, 2, 3, 3], dtype=jnp.int32)
    loss = jax.block_until_ready(margin_loss(embeds, labels, boundaries))
    ref = _reference_loss(np.asarray(embeds), np.asarray(labels),
                          np.asarray(boundaries), MARGIN, REG_WEIGHT,
                          NORMALIZE_EMBEDS)
    assert np.isfinite(float(loss))
    np.testing.assert_allclose(float(loss), ref, rtol=1e-4, atol=1e-4)

    # 2) Unaligned N and D exercise padding, the column-validity mask and the
    #    zero-weight padded-row path (no in-kernel bounds machinery anymore).
    N2, D2 = 13, 24
    e2 = jax.random.normal(k2, (N2, D2), dtype=jnp.float32)
    l2 = jax.random.randint(k3, (N2,), 0, NUM_CLASSES, dtype=jnp.int32)
    loss2 = jax.block_until_ready(margin_loss(e2, l2, boundaries))
    ref2 = _reference_loss(np.asarray(e2), np.asarray(l2),
                           np.asarray(boundaries), MARGIN, REG_WEIGHT,
                           NORMALIZE_EMBEDS)
    np.testing.assert_allclose(float(loss2), ref2, rtol=1e-4, atol=1e-4)

    # 3) Multi-tile (2x2) grid: accumulation along the "arbitrary" axis,
    #    per-row-tile partials along the "parallel" axis, diagonal exclusion
    #    only inside the i==j tiles.
    N3, D3 = 200, 48
    e3 = jax.random.normal(k4, (N3, D3), dtype=jnp.float32)
    l3 = jax.random.randint(k5, (N3,), 0, NUM_CLASSES, dtype=jnp.int32)
    loss3 = jax.block_until_ready(margin_loss(e3, l3, boundaries))
    ref3 = _reference_loss(np.asarray(e3), np.asarray(l3),
                           np.asarray(boundaries), MARGIN, REG_WEIGHT,
                           NORMALIZE_EMBEDS)
    np.testing.assert_allclose(float(loss3), ref3, rtol=1e-3, atol=1e-3)

    # 4) normalize_embeds=False path: precomputed squared norms feed the
    #    unified d^2 = |a|^2 + |b|^2 - 2<a,b> formula.
    N4, D4 = 24, 40
    e4 = jax.random.normal(k6, (N4, D4), dtype=jnp.float32)
    l4 = jax.random.randint(k7, (N4,), 0, NUM_CLASSES, dtype=jnp.int32)
    loss4 = jax.block_until_ready(
        margin_loss(e4, l4, boundaries, normalize_embeds=False))
    ref4 = _reference_loss(np.asarray(e4), np.asarray(l4),
                           np.asarray(boundaries), MARGIN, REG_WEIGHT, False)
    np.testing.assert_allclose(float(loss4), ref4, rtol=1e-3, atol=1e-3)

    # 5) bf16 MXU feed (recommended on v5e). Looser check: bf16 Gram products
    #    perturb hinge terms by O(1e-3); post-Gram math stays f32.
    loss_bf16 = jax.block_until_ready(
        margin_loss(embeds, labels, boundaries, mxu_dtype=jnp.bfloat16))
    assert np.isfinite(float(loss_bf16))
    np.testing.assert_allclose(float(loss_bf16), ref, rtol=1e-1, atol=5e-2)

    print("KERNEL_OK")
</pallas_src>

<mosaic_0001>
module attributes {stable_mosaic.version = 11 : i64} {
  func.func @_margin_loss_tile_kernel(%arg0: i32, %arg1: i32, %arg2: memref<8x128xf32, #tpu.memory_space<vmem>>, %arg3: memref<128x8xf32, #tpu.memory_space<vmem>>, %arg4: memref<8x8xf32, #tpu.memory_space<vmem>>, %arg5: memref<8x8xf32, #tpu.memory_space<vmem>>, %arg6: memref<8x128xf32, #tpu.memory_space<vmem>>) attributes {dimension_semantics = [#tpu.dimension_semantics<parallel>, #tpu.dimension_semantics<arbitrary>], iteration_bounds = array<i64: 1, 1>, scalar_prefetch = 0 : i64, scratch_operands = 0 : i64, tpu.core_type = #tpu.core_type<tc>, window_params = [{transform_indices = @transform_0, window_bounds = array<i64: 8, 128>}, {transform_indices = @transform_1, window_bounds = array<i64: 128, 8>}, {transform_indices = @transform_2, window_bounds = array<i64: 8, 8>}, {transform_indices = @transform_3, window_bounds = array<i64: 8, 8>}, {transform_indices = @transform_4, window_bounds = array<i64: 8, 128>}]} {
    %c0_i32 = arith.constant 0 : i32
    %0 = arith.cmpi eq, %arg1, %c0_i32 : i32
    %1 = arith.extui %0 : i1 to i32
    %c0_i32_0 = arith.constant 0 : i32
    %2 = arith.cmpi ne, %1, %c0_i32_0 : i32
    scf.if %2 {
      %cst_36 = arith.constant 0.000000e+00 : f32
      %122 = vector.broadcast %cst_36 : f32 to vector<8x128xf32>
      %c0_37 = arith.constant 0 : index
      %c0_38 = arith.constant 0 : index
      %123 = vector.load %arg6[%c0_37, %c0_38] : memref<8x128xf32, #tpu.memory_space<vmem>>, vector<8x128xf32>
      tpu.vector_store %arg6[%c0_37, %c0_38], %122 {strides = array<i32>} : memref<8x128xf32, #tpu.memory_space<vmem>>, vector<8x128xf32>,
    } else {
    }
    %c0 = arith.constant 0 : index
    %c0_1 = arith.constant 0 : index
    %3 = vector.load %arg4[%c0, %c0_1] : memref<8x8xf32, #tpu.memory_space<vmem>>, vector<8x8xf32>
    %4 = vector.extract_strided_slice %3 {offsets = [0, 0], sizes = [8, 1], strides = [1, 1]} : vector<8x8xf32> to vector<8x1xf32>
    %5 = vector.extract_strided_slice %3 {offsets = [0, 1], sizes = [8, 1], strides = [1, 1]} : vector<8x8xf32> to vector<8x1xf32>
    %6 = vector.extract_strided_slice %3 {offsets = [0, 2], sizes = [8, 1], strides = [1, 1]} : vector<8x8xf32> to vector<8x1xf32>
    %7 = vector.extract_strided_slice %3 {offsets = [0, 3], sizes = [8, 1], strides = [1, 1]} : vector<8x8xf32> to vector<8x1xf32>
    %8 = vector.extract_strided_slice %3 {offsets = [0, 4], sizes = [8, 1], strides = [1, 1]} : vector<8x8xf32> to vector<8x1xf32>
    %9 = vector.extract_strided_slice %3 {offsets = [0, 5], sizes = [8, 1], strides = [1, 1]} : vector<8x8xf32> to vector<8x1xf32>
    %10 = vector.extract_strided_slice %3 {offsets = [0, 6], sizes = [8, 1], strides = [1, 1]} : vector<8x8xf32> to vector<8x1xf32>
    %c0_2 = arith.constant 0 : index
    %c0_3 = arith.constant 0 : index
    %11 = vector.load %arg5[%c0_2, %c0_3] : memref<8x8xf32, #tpu.memory_space<vmem>>, vector<8x8xf32>
    %12 = vector.extract_strided_slice %11 {offsets = [0, 0], sizes = [1, 8], strides = [1, 1]} : vector<8x8xf32> to vector<1x8xf32>
    %13 = vector.extract_strided_slice %11 {offsets = [1, 0], sizes = [1, 8], strides = [1, 1]} : vector<8x8xf32> to vector<1x8xf32>
    %14 = vector.extract_strided_slice %11 {offsets = [2, 0], sizes = [1, 8], strides = [1, 1]} : vector<8x8xf32> to vector<1x8xf32>
    %cst = arith.constant 5.000000e-01 : f32
    %15 = vector.broadcast %cst : f32 to vector<1x8xf32>
    %16 = arith.cmpf ogt, %14, %15 : vector<1x8xf32>
    %17 = vector.extract_strided_slice %11 {offsets = [3, 0], sizes = [1, 8], strides = [1, 1]} : vector<8x8xf32> to vector<1x8xf32>
    %c0_4 = arith.constant 0 : index
    %c0_5 = arith.constant 0 : index
    %18 = vector.load %arg2[%c0_4, %c0_5] : memref<8x128xf32, #tpu.memory_space<vmem>>, vector<8x128xf32>
    %c0_6 = arith.constant 0 : index
    %c0_7 = arith.constant 0 : index
    %19 = vector.load %arg3[%c0_6, %c0_7] : memref<128x8xf32, #tpu.memory_space<vmem>>, vector<128x8xf32>
    %cst_8 = arith.constant dense<0.000000e+00> : vector<8x8xf32>
    %20 = tpu.matmul %18, %19, %cst_8 {dimension_numbers = #tpu.dot_dimension_numbers<[1], [0], [0], [1], [0, 0, 1, 1], [], []>} : vector<8x128xf32>, vector<128x8xf32>, vector<8x8xf32> -> vector<8x8xf32>
    %21 = vector.broadcast %9 : vector<8x1xf32> to vector<8x8xf32>
    %22 = vector.broadcast %13 : vector<1x8xf32> to vector<8x8xf32>
    %23 = arith.addf %21, %22 : vector<8x8xf32>
    %cst_9 = arith.constant 2.000000e+00 : f32
    %24 = vector.broadcast %cst_9 : f32 to vector<8x8xf32>
    %25 = arith.mulf %24, %20 : vector<8x8xf32>
    %26 = arith.subf %23, %25 : vector<8x8xf32>
    %cst_10 = arith.constant 0.000000e+00 : f32
    %27 = vector.broadcast %cst_10 : f32 to vector<8x8xf32>
    %28 = arith.maximumf %26, %27 : vector<8x8xf32>
    %29 = math.sqrt %28 : vector<8x8xf32>
    %30 = vector.broadcast %4 : vector<8x1xf32> to vector<8x8xf32>
    %31 = vector.broadcast %12 : vector<1x8xf32> to vector<8x8xf32>
    %32 = arith.cmpf oeq, %30, %31 : vector<8x8xf32>
    %33 = vector.broadcast %10 : vector<8x1xf32> to vector<8x8xf32>
    %34 = vector.broadcast %17 : vector<1x8xf32> to vector<8x8xf32>
    %35 = arith.cmpf one, %33, %34 : vector<8x8xf32>
    %36 = arith.andi %32, %35 : vector<8x8xi1>
    %cst_11 = arith.constant dense<true> : vector<8x8xi1>
    %37 = arith.xori %32, %cst_11 : vector<8x8xi1>
    %38 = vector.broadcast %16 : vector<1x8xi1> to vector<8x8xi1>
    %39 = arith.andi %37, %38 : vector<8x8xi1>
    %40 = vector.broadcast %5 : vector<8x1xf32> to vector<8x8xf32>
    %41 = arith.subf %29, %40 : vector<8x8xf32>
    %cst_12 = arith.constant 0.000000e+00 : f32
    %42 = vector.broadcast %cst_12 : f32 to vector<8x8xf32>
    %43 = arith.maximumf %41, %42 : vector<8x8xf32>
    %cst_13 = arith.constant 0.000000e+00 : f32
    %44 = vector.broadcast %cst_13 : f32 to vector<8x8xf32>
    %45 = arith.select %36, %43, %44 : vector<8x8xi1>, vector<8x8xf32>
    %46 = vector.broadcast %6 : vector<8x1xf32> to vector<8x8xf32>
    %47 = arith.subf %46, %29 : vector<8x8xf32>
    %cst_14 = arith.constant 0.000000e+00 : f32
    %48 = vector.broadcast %cst_14 : f32 to vector<8x8xf32>
    %49 = arith.maximumf %47, %48 : vector<8x8xf32>
    %cst_15 = arith.constant 0.000000e+00 : f32
    %50 = vector.broadcast %cst_15 : f32 to vector<8x8xf32>
    %51 = arith.select %39, %49, %50 : vector<8x8xi1>, vector<8x8xf32>
    %cst_16 = arith.constant dense<0.000000e+00> : vector<8xf32>
    %52 = vector.multi_reduction <add>, %45, %cst_16 [1] : vector<8x8xf32> to vector<8xf32>
    %53 = vector.shape_cast %52 : vector<8xf32> to vector<8x1xf32>
    %cst_17 = arith.constant 0.000000e+00 : f32
    %54 = vector.broadcast %cst_17 : f32 to vector<8x8xf32>
    %55 = arith.cmpf ogt, %45, %54 : vector<8x8xf32>
    %56 = arith.extui %55 : vector<8x8xi1> to vector<8x8xi32>
    %57 = arith.sitofp %56 : vector<8x8xi32> to vector<8x8xf32>
    %cst_18 = arith.constant dense<0.000000e+00> : vector<8xf32>
    %58 = vector.multi_reduction <add>, %57, %cst_18 [1] : vector<8x8xf32> to vector<8xf32>
    %59 = vector.shape_cast %58 : vector<8xf32> to vector<8x1xf32>
    %cst_19 = arith.constant dense<0.000000e+00> : vector<8xf32>
    %60 = vector.multi_reduction <add>, %51, %cst_19 [1] : vector<8x8xf32> to vector<8xf32>
    %61 = vector.shape_cast %60 : vector<8xf32> to vector<8x1xf32>
    %cst_20 = arith.constant 0.000000e+00 : f32
    %62 = vector.broadcast %cst_20 : f32 to vector<8x8xf32>
    %63 = arith.cmpf ogt, %51, %62 : vector<8x8xf32>
    %64 = arith.extui %63 : vector<8x8xi1> to vector<8x8xi32>
    %65 = arith.sitofp %64 : vector<8x8xi32> to vector<8x8xf32>
    %cst_21 = arith.constant dense<0.000000e+00> : vector<8xf32>
    %66 = vector.multi_reduction <add>, %65, %cst_21 [1] : vector<8x8xf32> to vector<8xf32>
    %67 = vector.shape_cast %66 : vector<8xf32> to vector<8x1xf32>
    %68 = arith.mulf %7, %53 : vector<8x1xf32>
    %69 = vector.shape_cast %68 : vector<8x1xf32> to vector<1x8x1xf32>
    %cst_22 = arith.constant dense<0.000000e+00> : vector<1xf32>
    %70 = vector.multi_reduction <add>, %69, %cst_22 [1, 2] : vector<1x8x1xf32> to vector<1xf32>
    %71 = vector.shape_cast %70 : vector<1xf32> to vector<1x1x1xf32>
    %72 = vector.extract %71[0, 0, 0] : f32 from vector<1x1x1xf32>
    %73 = arith.mulf %7, %59 : vector<8x1xf32>
    %74 = vector.shape_cast %73 : vector<8x1xf32> to vector<1x8x1xf32>
    %cst_23 = arith.constant dense<0.000000e+00> : vector<1xf32>
    %75 = vector.multi_reduction <add>, %74, %cst_23 [1, 2] : vector<1x8x1xf32> to vector<1xf32>
    %76 = vector.shape_cast %75 : vector<1xf32> to vector<1x1x1xf32>
    %77 = vector.extract %76[0, 0, 0] : f32 from vector<1x1x1xf32>
    %78 = arith.mulf %8, %61 : vector<8x1xf32>
    %79 = vector.shape_cast %78 : vector<8x1xf32> to vector<1x8x1xf32>
    %cst_24 = arith.constant dense<0.000000e+00> : vector<1xf32>
    %80 = vector.multi_reduction <add>, %79, %cst_24 [1, 2] : vector<1x8x1xf32> to vector<1xf32>
    %81 = vector.shape_cast %80 : vector<1xf32> to vector<1x1x1xf32>
    %82 = vector.extract %81[0, 0, 0] : f32 from vector<1x1x1xf32>
    %83 = arith.mulf %8, %67 : vector<8x1xf32>
    %84 = vector.shape_cast %83 : vector<8x1xf32> to vector<1x8x1xf32>
    %cst_25 = arith.constant dense<0.000000e+00> : vector<1xf32>
    %85 = vector.multi_reduction <add>, %84, %cst_25 [1, 2] : vector<1x8x1xf32> to vector<1xf32>
    %86 = vector.shape_cast %85 : vector<1xf32> to vector<1x1x1xf32>
    %87 = vector.extract %86[0, 0, 0] : f32 from vector<1x1x1xf32>
    %88 = tpu.iota {dimensions = array<i32: 1>} : vector<8x128xi32>
    %89 = tpu.iota {dimensions = array<i32: 0>} : vector<8x128xi32>
    %c0_i32_26 = arith.constant 0 : i32
    %90 = vector.broadcast %c0_i32_26 : i32 to vector<8x128xi32>
    %91 = arith.cmpi eq, %89, %90 : vector<8x128xi32>
    %c0_i32_27 = arith.constant 0 : i32
    %92 = vector.broadcast %c0_i32_27 : i32 to vector<8x128xi32>
    %93 = arith.cmpi eq, %88, %92 : vector<8x128xi32>
    %94 = arith.andi %91, %93 : vector<8x128xi1>
    %cst_28 = arith.constant 0.000000e+00 : f32
    %95 = vector.broadcast %72 : f32 to vector<8x128xf32>
    %96 = vector.broadcast %cst_28 : f32 to vector<8x128xf32>
    %97 = arith.select %94, %95, %96 : vector<8x128xi1>, vector<8x128xf32>
    %c1_i32 = arith.constant 1 : i32
    %98 = vector.broadcast %c1_i32 : i32 to vector<8x128xi32>
    %99 = arith.cmpi eq, %88, %98 : vector<8x128xi32>
    %100 = arith.andi %91, %99 : vector<8x128xi1>
    %cst_29 = arith.constant 0.000000e+00 : f32
    %101 = vector.broadcast %77 : f32 to vector<8x128xf32>
    %102 = vector.broadcast %cst_29 : f32 to vector<8x128xf32>
    %103 = arith.select %100, %101, %102 : vector<8x128xi1>, vector<8x128xf32>
    %104 = arith.addf %97, %103 : vector<8x128xf32>
    %c2_i32 = arith.constant 2 : i32
    %105 = vector.broadcast %c2_i32 : i32 to vector<8x128xi32>
    %106 = arith.cmpi eq, %88, %105 : vector<8x128xi32>
    %107 = arith.andi %91, %106 : vector<8x128xi1>
    %cst_30 = arith.constant 0.000000e+00 : f32
    %108 = vector.broadcast %82 : f32 to vector<8x128xf32>
    %109 = vector.broadcast %cst_30 : f32 to vector<8x128xf32>
    %110 = arith.select %107, %108, %109 : vector<8x128xi1>, vector<8x128xf32>
    %111 = arith.addf %104, %110 : vector<8x128xf32>
    %c3_i32 = arith.constant 3 : i32
    %112 = vector.broadcast %c3_i32 : i32 to vector<8x128xi32>
    %113 = arith.cmpi eq, %88, %112 : vector<8x128xi32>
    %114 = arith.andi %91, %113 : vector<8x128xi1>
    %cst_31 = arith.constant 0.000000e+00 : f32
    %115 = vector.broadcast %87 : f32 to vector<8x128xf32>
    %116 = vector.broadcast %cst_31 : f32 to vector<8x128xf32>
    %117 = arith.select %114, %115, %116 : vector<8x128xi1>, vector<8x128xf32>
    %118 = arith.addf %111, %117 : vector<8x128xf32>
    %c0_32 = arith.constant 0 : index
    %c0_33 = arith.constant 0 : index
    %119 = vector.load %arg6[%c0_32, %c0_33] : memref<8x128xf32, #tpu.memory_space<vmem>>, vector<8x128xf32>
    %120 = arith.addf %119, %118 : vector<8x128xf32>
    %c0_34 = arith.constant 0 : index
    %c0_35 = arith.constant 0 : index
    %121 = vector.load %arg6[%c0_34, %c0_35] : memref<8x128xf32, #tpu.memory_space<vmem>>, vector<8x128xf32>
    tpu.vector_store %arg6[%c0_34, %c0_35], %120 {strides = array<i32>} : memref<8x128xf32, #tpu.memory_space<vmem>>, vector<8x128xf32>,
    return
  }
  func.func @transform_0(%arg0: i32, %arg1: i32) -> (i32, i32) {
    %c0_i32 = arith.constant 0 : i32
    %c0_i32_0 = arith.constant 0 : i32
    return %arg0, %c0_i32 : i32, i32
  }
  func.func @transform_1(%arg0: i32, %arg1: i32) -> (i32, i32) {
    %c0_i32 = arith.constant 0 : i32
    %c0_i32_0 = arith.constant 0 : i32
    return %c0_i32, %arg1 : i32, i32
  }
  func.func @transform_2(%arg0: i32, %arg1: i32) -> (i32, i32) {
    %c0_i32 = arith.constant 0 : i32
    %c0_i32_0 = arith.constant 0 : i32
    return %arg0, %c0_i32 : i32, i32
  }
  func.func @transform_3(%arg0: i32, %arg1: i32) -> (i32, i32) {
    %c0_i32 = arith.constant 0 : i32
    %c0_i32_0 = arith.constant 0 : i32
    return %c0_i32, %arg1 : i32, i32
  }
  func.func @transform_4(%arg0: i32, %arg1: i32) -> (i32, i32) {
    %c0_i32 = arith.constant 0 : i32
    %c0_i32_0 = arith.constant 0 : i32
    return %arg0, %c0_i32 : i32, i32
  }
}

</mosaic_0001>

<llo_original>
// kernel: tpu_custom_call.1
$region0: #{tpu_custom_call.1}
  #allocation0 [shape = 'u32[]', space=smem, size = 0x4, offset = 0x4, fixed_abs, tag = 'smem constant byte address 0x4 - core index']
  #allocation1 [shape = 'u32[72,128]{1,0:T(1,128)}', space=vmem, size = 0x9000, scoped, tag = 'internal scratch']
  %s0 = inlined_call_operand.vmem [shape: f32[8,128], index: 0, kind: input, shape index: {}]
  %s1 = inlined_call_operand.vmem [shape: f32[128,8], index: 1, kind: input, shape index: {}]
  %s2 = inlined_call_operand.vmem [shape: f32[8,8], index: 2, kind: input, shape index: {}]
  %s3 = inlined_call_operand.vmem [shape: f32[8,8], index: 3, kind: input, shape index: {}]
  %s4 = inlined_call_operand.hbm [shape: f32[8,128], index: 4, kind: output, shape index: {}]
  %s5 = sld [smem:[#allocation0]]
  $region30: #{tpu_custom_call.1} parent=0
    _
  %s7 = ssub.s32 1, %s5
  %s8 = scalar_select 0, %s7, %s5
  $region1: #{tpu_custom_call.1} parent=0
    #allocation2 [shape = 'u8[4096]{0}', space=vmem, size = 0x1000, scoped, tag = 'output window, operand 0, single buffered']
    #allocation3 [shape = 's32[1]{0}', space=sflag, size = 0x4, scoped, tag = 'scoped memory for tpu_custom_call.1']
    %9 = vsyncpa [#allocation3], 0
    // Predicated region
    $region2: #{tpu_custom_call.1} parent=1 // pred_check
      _
    $region3: #{tpu_custom_call.1} parent=1 // pred_check_branch
      %11 = sbr.rel (0) target = $region5
    $region4: #{tpu_custom_call.1} parent=1 // pred_region
      _
    $region5: #{tpu_custom_call.1} parent=1 // pred_fallthru
      _
    // Predicated region
    $region6: #{tpu_custom_call.1} parent=1 // pred_check
      _
    $region7: #{tpu_custom_call.1} parent=1 // pred_check_branch
      %13 = sbr.rel (0) target = $region9
    $region8: #{tpu_custom_call.1} parent=1 // pred_region
      _
    $region9: #{tpu_custom_call.1} parent=1 // pred_fallthru
      _
    // Predicated region
    $region10: #{tpu_custom_call.1} parent=1 // pred_check
      _
    $region11: #{tpu_custom_call.1} parent=1 // pred_check_branch
      %15 = sbr.rel (0) target = $region13
    $region12: #{tpu_custom_call.1} parent=1 // pred_region
      _
    $region13: #{tpu_custom_call.1} parent=1 // pred_fallthru
      _
    // Predicated region
    $region14: #{tpu_custom_call.1} parent=1 // pred_check
      _
    $region15: #{tpu_custom_call.1} parent=1 // pred_check_branch
      %17 = sbr.rel (0) target = $region17
    $region16: #{tpu_custom_call.1} parent=1 // pred_region
      _
    $region17: #{tpu_custom_call.1} parent=1 // pred_fallthru
      _
    %p18 = scmp.eq.s32.totalorder 0, 0
    // Predicated region
    $region18: #{tpu_custom_call.1} parent=1 // pred_check
      %p19 = pneg %p18
    $region19: #{tpu_custom_call.1} parent=1 // pred_check_branch
      %21 = sbr.rel (%p19) target = $region21
    $region20: #{tpu_custom_call.1} parent=1 // pred_region
      %22 = vst [vmem:[#allocation2] sm:$0xff] 0.0
    $region21: #{tpu_custom_call.1} parent=1 // pred_fallthru
      _
    %v23 = vld [vmem:[%s2] sm:$0xff]
    %v24 = vld [vmem:[%s3] sm:$0xff]
    %vm25 = vcmp.gt.f32.partialorder %v24, 0.5
    %v26 = vld [vmem:[%s0] sm:$0xff]
    %v27 = vld [vmem:[%s1] sm:$0xff]
    %v28 = vld [vmem:[%s1 + $0x8] sm:$0xff]
    %v29 = vld [vmem:[%s1 + $0x10] sm:$0xff]
    %v30 = vld [vmem:[%s1 + $0x18] sm:$0xff]
    %v31 = vld [vmem:[%s1 + $0x20] sm:$0xff]
    %v32 = vld [vmem:[%s1 + $0x28] sm:$0xff]
    %v33 = vld [vmem:[%s1 + $0x30] sm:$0xff]
    %v34 = vld [vmem:[%s1 + $0x38] sm:$0xff]
    %v35 = vld [vmem:[%s1 + $0x40] sm:$0xff]
    %v36 = vld [vmem:[%s1 + $0x48] sm:$0xff]
    %v37 = vld [vmem:[%s1 + $0x50] sm:$0xff]
    %v38 = vld [vmem:[%s1 + $0x58] sm:$0xff]
    %v39 = vld [vmem:[%s1 + $0x60] sm:$0xff]
    %v40 = vld [vmem:[%s1 + $0x68] sm:$0xff]
    %v41 = vld [vmem:[%s1 + $0x70] sm:$0xff]
    %v42 = vld [vmem:[%s1 + $0x78] sm:$0xff]
    %43 = vmatpush.msra.mxu0 %v42
    %44 = vmatpush.msra.mxu0 %v41
    %45 = vmatpush.msra.mxu0 %v40
    %46 = vmatpush.msra.mxu0 %v39
    %47 = vmatpush.msra.mxu0 %v38
    %48 = vmatpush.msra.mxu0 %v37
    %49 = vmatpush.msra.mxu0 %v36
    %50 = vmatpush.msra.mxu0 %v35
    %51 = vmatpush.msra.mxu0 %v34
    %52 = vmatpush.msra.mxu0 %v33
    %53 = vmatpush.msra.mxu0 %v32
    %54 = vmatpush.msra.mxu0 %v31
    %55 = vmatpush.msra.mxu0 %v30
    %56 = vmatpush.msra.mxu0 %v29
    %57 = vmatpush.msra.mxu0 %v28
    %58 = vmatpush.msra.mxu0 %v27
    %59 = vmatmul.f32.gmra.mxu0 %v26
    %v60 = vpop.f32.mrf.mxu0
    %v61 = vadd.f32 0.0, %v60
    %62 = vdwg.mxu0
    %64 = vset.pattern.permute.xlu0 5
    %65 = vperm.xlu0 %64, %v23
    %v66 = vpop.permute.xlu0 %65
    %v68 = vperm.slane %v24, 1
    %v69 = vadd.f32 %v66, %v68
    %v70 = vmul.f32 %v61, 2.0
    %v71 = vsub.f32 %v69, %v70
    %v72 = vmax.f32 %v71, 0.0
    %v73 = vrsqrt.pop %v72
    %v74 = vmul.f32 %v73, %v72
    %v75 = vmul.f32 %v74, %v73
    %v76 = vmul.f32 0.5, %v75
    %v77 = vsub.f32 1.5, %v76
    %v78 = vmul.f32 %v73, %v77
    %v79 = vmul.f32 %v72, %v78
    %vm80 = vcmp.eq.f32.partialorder %v72, inf
    %v81 = vsel %vm80, %v72, %v79
    %vm82 = vcmp.eq.f32.partialorder %v72, 0.0
    %v83 = vand.u32 %v72, 2147483648
    %v84 = vsel %vm82, %v83, %v81
    %85 = vset.pattern.permute.xlu0 0
    %86 = vperm.xlu0 %85, %v23
    %v87 = vpop.permute.xlu0 %86
    %v89 = vperm.slane %v24, 0
    %vm90 = vcmp.eq.f32.partialorder %v87, %v89
    %91 = vset.pattern.permute.xlu0 6
    %92 = vperm.xlu0 %91, %v23
    %v93 = vpop.permute.xlu0 %92
    %v95 = vperm.slane %v24, 3
    %vm96 = vcmp.ne.f32.partialorder %v93, %v95
    %vm97 = vmand %vm90, %vm96
    %vm98 = vmxor %vm90, 1
    %v99 = vsel %vm25, 1, 0
    %v100 = vperm.slane %v99, 2
    %vm101 = vcmp.eq.s32.totalorder %v100, 1
    %vm102 = vmand %vm98, %vm101
    %103 = vset.pattern.permute.xlu0 1
    %104 = vperm.xlu0 %103, %v23
    %v105 = vpop.permute.xlu0 %104
    %v107 = vsub.f32 %v84, %v105
    %v108 = vmax.f32 %v107, 0.0
    %v109 = vsel %vm97, %v108, 0.0
    %110 = vset.pattern.permute.xlu0 2
    %111 = vperm.xlu0 %110, %v23
    %v112 = vpop.permute.xlu0 %111
    %v114 = vsub.f32 %v112, %v84
    %v115 = vmax.f32 %v114, 0.0
    %v116 = vsel %vm102, %v115, 0.0
    %vm117 = vcmask 64512
    %v118 = vsel %vm117, %v109, 0.0
    %119 = vadd.xlane.f32.xlu0 %v118
    %v120 = vpop.xlane.xlu0 %119
    %vm121 = vcmp.gt.f32.partialorder %v109, 0.0
    %v122 = vsel %vm121, 1, 0
    %v123 = vcvt.s32.f32 %v122
    %v124 = vsel %vm117, %v123, 0.0
    %125 = vadd.xlane.f32.xlu0 %v124
    %v126 = vpop.xlane.xlu0 %125
    %v127 = vsel %vm117, %v116, 0.0
    %128 = vadd.xlane.f32.xlu0 %v127
    %v129 = vpop.xlane.xlu0 %128
    %vm130 = vcmp.gt.f32.partialorder %v116, 0.0
    %v131 = vsel %vm130, 1, 0
    %v132 = vcvt.s32.f32 %v131
    %v133 = vsel %vm117, %v132, 0.0
    %134 = vadd.xlane.f32.xlu0 %v133
    %v135 = vpop.xlane.xlu0 %134
    %v136 = vmul.f32 %v23, %v120
    %138 = vrot.lane.b32.xlu0 %v136, 125
    %v139 = vpop.permute.xlu0 %138
    %vm141 = vcmask 7168
    %v142 = vsel %vm141, %v139, 0.0
    %143 = vadd.xlane.f32.xlu0 %v142
    %v144 = vpop.xlane.xlu0 %143
    %v145 = vrot.slane %v144, 4
    %v146 = vadd.f32 %v144, %v145
    %v147 = vrot.slane %v146, 2
    %v148 = vadd.f32 %v146, %v147
    %v149 = vrot.slane %v148, 1
    %v150 = vadd.f32 %v148, %v149
    %s151 = vtos %v150
    %v152 = vmul.f32 %v23, %v126
    %154 = vrot.lane.b32.xlu0 %v152, 125
    %v155 = vpop.permute.xlu0 %154
    %v157 = vsel %vm141, %v155, 0.0
    %158 = vadd.xlane.f32.xlu0 %v157
    %v159 = vpop.xlane.xlu0 %158
    %v160 = vrot.slane %v159, 4
    %v161 = vadd.f32 %v159, %v160
    %v162 = vrot.slane %v161, 2
    %v163 = vadd.f32 %v161, %v162
    %v164 = vrot.slane %v163, 1
    %v165 = vadd.f32 %v163, %v164
    %s166 = vtos %v165
    %v167 = vmul.f32 %v23, %v129
    %169 = vrot.lane.b32.xlu0 %v167, 124
    %v170 = vpop.permute.xlu0 %169
    %v172 = vsel %vm141, %v170, 0.0
    %173 = vadd.xlane.f32.xlu0 %v172
    %v174 = vpop.xlane.xlu0 %173
    %v175 = vrot.slane %v174, 4
    %v176 = vadd.f32 %v174, %v175
    %v177 = vrot.slane %v176, 2
    %v178 = vadd.f32 %v176, %v177
    %v179 = vrot.slane %v178, 1
    %v180 = vadd.f32 %v178, %v179
    %s181 = vtos %v180
    %v182 = vmul.f32 %v23, %v135
    %184 = vrot.lane.b32.xlu0 %v182, 124
    %v185 = vpop.permute.xlu0 %184
    %v187 = vsel %vm141, %v185, 0.0
    %188 = vadd.xlane.f32.xlu0 %v187
    %v189 = vpop.xlane.xlu0 %188
    %v190 = vrot.slane %v189, 4
    %v191 = vadd.f32 %v189, %v190
    %v192 = vrot.slane %v191, 2
    %v193 = vadd.f32 %v191, %v192
    %v194 = vrot.slane %v193, 1
    %v195 = vadd.f32 %v193, %v194
    %s196 = vtos %v195
    %v197 = vlaneseq
    %v198 = vand.u32 %v197, 127
    %v199 = vlaneseq
    %v200 = vshrl.u32 %v199, 7
    %vm201 = vcmp.eq.s32.totalorder %v200, 0
    %vm202 = vcmp.eq.s32.totalorder %v198, 0
    %vm203 = vmand %vm201, %vm202
    %v204 = vstv %s151
    %v205 = vsel %vm203, %v204, 0.0
    %vm206 = vcmp.eq.s32.totalorder %v198, 1
    %vm207 = vmand %vm201, %vm206
    %v208 = vstv %s166
    %v209 = vsel %vm207, %v208, 0.0
    %v210 = vadd.f32 %v205, %v209
    %vm211 = vcmp.eq.s32.totalorder %v198, 2
    %vm212 = vmand %vm201, %vm211
    %v213 = vstv %s181
    %v214 = vsel %vm212, %v213, 0.0
    %v215 = vadd.f32 %v210, %v214
    %vm216 = vcmp.eq.s32.totalorder %v198, 3
    %vm217 = vmand %vm201, %vm216
    %v218 = vstv %s196
    %v219 = vsel %vm217, %v218, 0.0
    %v220 = vadd.f32 %v215, %v219
    %v221 = vld [vmem:[#allocation2] sm:$0xff]
    %v222 = vadd.f32 %v221, %v220
    %223 = vst [vmem:[#allocation2] sm:$0xff] %v222
    // Predicated region
    $region22: #{tpu_custom_call.1} parent=1 // pred_check
      _
    $region23: #{tpu_custom_call.1} parent=1 // pred_check_branch
      %225 = sbr.rel (0) target = $region25
    $region24: #{tpu_custom_call.1} parent=1 // pred_region
      %227 = vsyncadd [#allocation3], 0
      %s229 = sshll.u32 [#allocation2], 4
      %s230 = int_to_ptr.vmem [resolvable:$true] %s229
      %s231 = sshll.u32 %s4, 4
      %s232 = int_to_ptr.hbm [resolvable:$true] %s231
      %234 = dma.vmem_to_hbm [thread:$0]  %s230, 128, %s232, [#allocation3]
    $region25: #{tpu_custom_call.1} parent=1 // pred_fallthru
      _
    // Predicated region
    $region26: #{tpu_custom_call.1} parent=1 // pred_check
      _
    $region27: #{tpu_custom_call.1} parent=1 // pred_check_branch
      %236 = sbr.rel (0) target = $region29
    $region28: #{tpu_custom_call.1} parent=1 // pred_region
      %238 = dma.done [#allocation3], 128
    $region29: #{tpu_custom_call.1} parent=1 // pred_fallthru
      _
    %239 = vsyncpa [#allocation3], 1

</llo_original>
